<compile_context>
chip_gen: v6e
topology: v6e:2x2x1
jax: 0.10.0
libtpu: 0.0.40
codegen_flags: <defaults>
</compile_context>

<pallas_src>
import jax
import jax.numpy as jnp
from jax import lax
from jax.experimental import pallas as pl
from jax.experimental.pallas import tpu as pltpu

IN_FEATURES = 1024
NUM_CLASSES = 4


def _linear_kernel(x_ref, w_ref, b_ref, o_ref):
    # x_ref: (TB, IN)   feats tile (streamed per grid step)
    # w_ref: (OUT, IN)  weight in native nn.Linear layout (constant block
    #                   index -> resident in VMEM, DMA'd once)
    # b_ref: (1, OUT)   bias (constant block index -> resident)
    # o_ref: (TB, OUT)  output tile
    acc = lax.dot_general(
        x_ref[...], w_ref[...],
        dimension_numbers=(((1,), (1,)), ((), ())),   # feats @ W.T on the MXU
        preferred_element_type=jnp.float32)
    o_ref[...] = (acc + b_ref[...]).astype(o_ref.dtype)


def _round_up(x, m):
    return ((x + m - 1) // m) * m


def cls_model_train_forward(feats, weight, bias, *, block_b=2048):
    """Pallas equivalent of ClsModelTrain.forward(feats).

    feats:  [B, 1024] float32
    weight: [num_classes, 1024] float32   (PyTorch nn.Linear layout, un-transposed)
    bias:   [num_classes] float32
    returns [B, num_classes] float32
    """
    B, in_f = feats.shape
    out_f, in_f_w = weight.shape
    assert in_f == in_f_w

    # Glue (plain JAX): only the bias needs to become 2-D for TPU.
    b2d = bias.reshape(1, out_f)

    # ---- Batch tile -------------------------------------------------------
    # 2048 rows of f32 feats = 8 MiB/tile:
    #   v7x (~3.2 TB/s): ~2.6 us DMA -> per-step overhead ~12% (vs ~35% at 512)
    #   v6e (~1.4 TB/s): ~6 us DMA   -> ~6%
    #   v5e (~0.8 TB/s): ~10 us DMA  -> ~3.5%
    # Never allocate bigger than the (sublane-rounded) batch.
    block_b = max(8, (block_b // 8) * 8)
    tb = min(block_b, max(8, _round_up(B, 8)))

    # Megacore (v7x = 2 TensorCores/chip): for mid-size batches make sure the
    # grid has >= 2 "parallel" steps so both cores get work.  For B <= 512 the
    # kernel is launch-bound and splitting only adds per-step overhead.
    if B > 512 and pl.cdiv(B, tb) < 2:
        tb = max(8, _round_up(pl.cdiv(B, 2), 8))

    grid = (pl.cdiv(B, tb),)

    # ---- Explicit VMEM budget ----------------------------------------------
    # Double-buffered feats + output tiles plus the (tiny) resident weight and
    # bias, with 25% headroom.  Passing this explicitly lets 2048-row tiles
    # work on v5e (16 MiB scoped default) while staying far under every
    # generation's physical VMEM (64 MiB/TC on v7x, 128 MiB on v5e/v6e).
    lane = 128
    feats_bytes = 2 * tb * in_f * 4
    out_bytes = 2 * tb * _round_up(out_f, lane) * 4
    w_bytes = 2 * _round_up(out_f, 8) * in_f * 4
    b_bytes = 2 * 8 * lane * 4
    vmem_limit = int((feats_bytes + out_bytes + w_bytes + b_bytes) * 1.25) + (1 << 20)
    vmem_limit = min(max(vmem_limit, 4 << 20), 60 << 20)

    # Advisory cost hint so XLA schedules this bandwidth-heavy call sensibly
    # inside a larger training graph.
    cost = pl.CostEstimate(
        flops=2 * B * in_f * out_f,
        bytes_accessed=(B * in_f + B * out_f + out_f * in_f + out_f) * 4,
        transcendentals=0)

    # No jnp.pad of feats (that would double its HBM traffic): the grid is
    # cdiv(B, tb) and Pallas masks the out-of-bounds rows of the ragged last
    # block, so the output is written at its true shape (B, out_f).
    out = pl.pallas_call(
        _linear_kernel,
        out_shape=jax.ShapeDtypeStruct((B, out_f), feats.dtype),
        grid_spec=pltpu.PrefetchScalarGridSpec(
            num_scalar_prefetch=0,
            grid=grid,
            in_specs=[
                pl.BlockSpec((tb, in_f), lambda i: (i, 0)),      # feats tile (streamed)
                pl.BlockSpec((out_f, in_f), lambda i: (0, 0)),   # full weight (resident)
                pl.BlockSpec((1, out_f), lambda i: (0, 0)),      # bias (resident)
            ],
            out_specs=pl.BlockSpec((tb, out_f), lambda i: (i, 0)),
        ),
        compiler_params=pltpu.CompilerParams(
            dimension_semantics=("parallel",),
            vmem_limit_bytes=vmem_limit),
        cost_estimate=cost,
    )(feats, weight, b2d)

    return out


if __name__ == "__main__":
    key = jax.random.PRNGKey(0)
    k_feat, k_w, k_b, k_feat2, k_feat3 = jax.random.split(key, 5)

    # Deterministic parameter init mimicking nn.Linear's uniform(-1/sqrt(in), 1/sqrt(in)).
    bound = 1.0 / (IN_FEATURES ** 0.5)
    weight = jax.random.uniform(
        k_w, (NUM_CLASSES, IN_FEATURES), minval=-bound, maxval=bound,
        dtype=jnp.float32)
    bias = jax.random.uniform(
        k_b, (NUM_CLASSES,), minval=-bound, maxval=bound, dtype=jnp.float32)

    # Small batch (single tile).
    B = 8
    feats = jax.random.normal(k_feat, (B, IN_FEATURES), dtype=jnp.float32)
    out = jax.block_until_ready(cls_model_train_forward(feats, weight, bias))
    ref = feats @ weight.T + bias
    assert out.shape == (B, NUM_CLASSES)
    assert jnp.allclose(out, ref, atol=1e-4, rtol=1e-4)

    # Ragged batch (not a multiple of 8): pad-free masked last-block path.
    B2 = 300
    feats2 = jax.random.normal(k_feat2, (B2, IN_FEATURES), dtype=jnp.float32)
    out2 = jax.block_until_ready(cls_model_train_forward(feats2, weight, bias))
    ref2 = feats2 @ weight.T + bias
    assert out2.shape == (B2, NUM_CLASSES)
    assert jnp.allclose(out2, ref2, atol=1e-4, rtol=1e-4)

    # Mid-size ragged batch (> 512): exercises the forced >=2-step grid path
    # (two-TensorCore sharding on v7x) plus the masked last block.
    B3 = 597
    feats3 = jax.random.normal(k_feat3, (B3, IN_FEATURES), dtype=jnp.float32)
    out3 = jax.block_until_ready(cls_model_train_forward(feats3, weight, bias))
    ref3 = feats3 @ weight.T + bias
    assert out3.shape == (B3, NUM_CLASSES)
    assert jnp.allclose(out3, ref3, atol=1e-4, rtol=1e-4)

    print("KERNEL_OK")
</pallas_src>

<mosaic_0001>
module attributes {stable_mosaic.version = 11 : i64} {
  func.func @_linear_kernel(%arg0: i32, %arg1: memref<8x1024xf32, #tpu.memory_space<vmem>>, %arg2: memref<4x1024xf32, #tpu.memory_space<vmem>>, %arg3: memref<1x4xf32, #tpu.memory_space<vmem>>, %arg4: memref<8x4xf32, #tpu.memory_space<vmem>>) attributes {dimension_semantics = [#tpu.dimension_semantics<parallel>], iteration_bounds = array<i64: 1>, scalar_prefetch = 0 : i64, scratch_operands = 0 : i64, tpu.core_type = #tpu.core_type<tc>, window_params = [{transform_indices = @transform_0, window_bounds = array<i64: 8, 1024>}, {pipeline_mode = #tpu.pipeline_mode<synchronous>, transform_indices = @transform_1, window_bounds = array<i64: 4, 1024>}, {pipeline_mode = #tpu.pipeline_mode<synchronous>, transform_indices = @transform_2, window_bounds = array<i64: 1, 4>}, {transform_indices = @transform_3, window_bounds = array<i64: 8, 4>}]} {
    %c0 = arith.constant 0 : index
    %c0_0 = arith.constant 0 : index
    %0 = vector.load %arg1[%c0, %c0_0] : memref<8x1024xf32, #tpu.memory_space<vmem>>, vector<8x1024xf32>
    %c0_1 = arith.constant 0 : index
    %c0_2 = arith.constant 0 : index
    %1 = vector.load %arg2[%c0_1, %c0_2] : memref<4x1024xf32, #tpu.memory_space<vmem>>, vector<4x1024xf32>
    %cst = arith.constant dense<0.000000e+00> : vector<8x4xf32>
    %2 = tpu.matmul %0, %1, %cst {dimension_numbers = #tpu.dot_dimension_numbers<[1], [1], [0], [0], [0, 0, 1, 0], [], []>} : vector<8x1024xf32>, vector<4x1024xf32>, vector<8x4xf32> -> vector<8x4xf32>
    %c0_3 = arith.constant 0 : index
    %c0_4 = arith.constant 0 : index
    %3 = vector.load %arg3[%c0_3, %c0_4] : memref<1x4xf32, #tpu.memory_space<vmem>>, vector<1x4xf32>
    %4 = vector.broadcast %3 : vector<1x4xf32> to vector<8x4xf32>
    %5 = arith.addf %2, %4 : vector<8x4xf32>
    %c0_5 = arith.constant 0 : index
    %c0_6 = arith.constant 0 : index
    %6 = vector.load %arg4[%c0_5, %c0_6] : memref<8x4xf32, #tpu.memory_space<vmem>>, vector<8x4xf32>
    tpu.vector_store %arg4[%c0_5, %c0_6], %5 {strides = array<i32>} : memref<8x4xf32, #tpu.memory_space<vmem>>, vector<8x4xf32>,
    return
  }
  func.func @transform_0(%arg0: i32) -> (i32, i32) {
    %c0_i32 = arith.constant 0 : i32
    %c0_i32_0 = arith.constant 0 : i32
    return %arg0, %c0_i32 : i32, i32
  }
  func.func @transform_1(%arg0: i32) -> (i32, i32) {
    %c0_i32 = arith.constant 0 : i32
    %c0_i32_0 = arith.constant 0 : i32
    %c0_i32_1 = arith.constant 0 : i32
    return %c0_i32, %c0_i32_0 : i32, i32
  }
  func.func @transform_2(%arg0: i32) -> (i32, i32) {
    %c0_i32 = arith.constant 0 : i32
    %c0_i32_0 = arith.constant 0 : i32
    %c0_i32_1 = arith.constant 0 : i32
    return %c0_i32, %c0_i32_0 : i32, i32
  }
  func.func @transform_3(%arg0: i32) -> (i32, i32) {
    %c0_i32 = arith.constant 0 : i32
    %c0_i32_0 = arith.constant 0 : i32
    return %arg0, %c0_i32 : i32, i32
  }
}

</mosaic_0001>

<llo_original>
// kernel: tpu_custom_call.1
$region0: #{tpu_custom_call.1}
  #allocation0 [shape = 'u32[]', space=smem, size = 0x4, offset = 0x4, fixed_abs, tag = 'smem constant byte address 0x4 - core index']
  #allocation1 [shape = 'u32[144,128]{1,0:T(1,128)}', space=vmem, size = 0x12000, scoped, tag = 'internal scratch']
  %s0 = inlined_call_operand.hbm [shape: f32[8,1024], index: 0, kind: input, shape index: {}]
  %s1 = inlined_call_operand.hbm [shape: f32[4,1024], index: 1, kind: input, shape index: {}]
  %s2 = inlined_call_operand.vmem [shape: f32[1,4], index: 2, kind: input, shape index: {}]
  %s3 = inlined_call_operand.vmem [shape: f32[8,4], index: 3, kind: output, shape index: {}]
  %s4 = sld [smem:[#allocation0]]
  $region30: #{tpu_custom_call.1} parent=0
    _
  %s6 = ssub.s32 1, %s4
  %s7 = scalar_select 0, %s6, %s4
  $region1: #{tpu_custom_call.1} parent=0
    #allocation2 [shape = 'u8[32768]{0}', space=vmem, size = 0x8000, scoped, tag = 'input window, operand 0, single buffered']
    #allocation3 [shape = 's32[1]{0}', space=sflag, size = 0x4, scoped, tag = 'scoped memory for tpu_custom_call.1']
    #allocation4 [shape = 'u8[16384]{0}', space=vmem, size = 0x4000, scoped, tag = 'input window, operand 1, single buffered']
    #allocation5 [shape = 's32[1]{0}', space=sflag, size = 0x4, scoped, tag = 'scoped memory for tpu_custom_call.1']
    %8 = vsyncpa [#allocation3], 0
    %9 = vsyncpa [#allocation5], 0
    // Predicated region
    $region2: #{tpu_custom_call.1} parent=1 // pred_check
      _
    $region3: #{tpu_custom_call.1} parent=1 // pred_check_branch
      %11 = sbr.rel (0) target = $region5
    $region4: #{tpu_custom_call.1} parent=1 // pred_region
      %s13 = ssub.s32 1024, 1024
      %14 = vsyncadd [#allocation3], %s13
      %s16 = sshll.u32 [#allocation2], 4
      %s17 = int_to_ptr.vmem [resolvable:$true] %s16
      %19 = dma.hbm_to_vmem [thread:$0]  %s0, 1024, %s17, [#allocation3]
    $region5: #{tpu_custom_call.1} parent=1 // pred_fallthru
      _
    // Predicated region
    $region6: #{tpu_custom_call.1} parent=1 // pred_check
      _
    $region7: #{tpu_custom_call.1} parent=1 // pred_check_branch
      %21 = sbr.rel (0) target = $region9
    $region8: #{tpu_custom_call.1} parent=1 // pred_region
      %s23 = ssub.s32 512, 512
      %24 = vsyncadd [#allocation5], %s23
      %s26 = sshll.u32 [#allocation4], 4
      %s27 = int_to_ptr.vmem [resolvable:$true] %s26
      %29 = dma.hbm_to_vmem [thread:$0]  %s1, 512, %s27, [#allocation5]
    $region9: #{tpu_custom_call.1} parent=1 // pred_fallthru
      _
    // Predicated region
    $region10: #{tpu_custom_call.1} parent=1 // pred_check
      _
    $region11: #{tpu_custom_call.1} parent=1 // pred_check_branch
      %31 = sbr.rel (0) target = $region13
    $region12: #{tpu_custom_call.1} parent=1 // pred_region
      _
    $region13: #{tpu_custom_call.1} parent=1 // pred_fallthru
      _
    // Predicated region
    $region14: #{tpu_custom_call.1} parent=1 // pred_check
      _
    $region15: #{tpu_custom_call.1} parent=1 // pred_check_branch
      %33 = sbr.rel (0) target = $region17
    $region16: #{tpu_custom_call.1} parent=1 // pred_region
      %34 = dma.done [#allocation3], 1024
    $region17: #{tpu_custom_call.1} parent=1 // pred_fallthru
      _
    // Predicated region
    $region18: #{tpu_custom_call.1} parent=1 // pred_check
      _
    $region19: #{tpu_custom_call.1} parent=1 // pred_check_branch
      %36 = sbr.rel (0) target = $region21
    $region20: #{tpu_custom_call.1} parent=1 // pred_region
      %37 = dma.done [#allocation5], 512
    $region21: #{tpu_custom_call.1} parent=1 // pred_fallthru
      _
    %v38 = vld [vmem:[#allocation2] sm:$0xff]
    %v39 = vld [vmem:[#allocation2 + $0x8] sm:$0xff]
    %v40 = vld [vmem:[#allocation2 + $0x10] sm:$0xff]
    %v41 = vld [vmem:[#allocation2 + $0x18] sm:$0xff]
    %v42 = vld [vmem:[#allocation2 + $0x20] sm:$0xff]
    %v43 = vld [vmem:[#allocation2 + $0x28] sm:$0xff]
    %v44 = vld [vmem:[#allocation2 + $0x30] sm:$0xff]
    %v45 = vld [vmem:[#allocation2 + $0x38] sm:$0xff]
    %v46 = vld [vmem:[#allocation4] sm:$0xff]
    %v47 = vld [vmem:[#allocation4 + $0x8] sm:$0xff]
    %v48 = vld [vmem:[#allocation4 + $0x10] sm:$0xff]
    %v49 = vld [vmem:[#allocation4 + $0x18] sm:$0xff]
    %v50 = vld [vmem:[%s2] sm:$0x1]
    %v52 = vlaneseq
    %v53 = vshrl.u32 %v52, 7
    %v54 = vsub.s32 0, %v53
    %v55 = vrot.slane %v50, %v54
    %v61 = vcombine.high %v46, %v46
    %v62 = vcombine.high %v47, %v47
    %v63 = vcombine.high %v48, %v48
    %v64 = vcombine.high %v49, %v49
    %69 = vmatprep.subr.mxu0 0.0
    %70 = vmatpush1.xpose.msra.mxu0 0.0
    %71 = vmatprep.subr.mxu0 0.0
    %72 = vmatpush1.xpose.msra.mxu0 0.0
    %73 = vmatprep.subr.mxu0 0.0
    %74 = vmatpush1.xpose.msra.mxu0 0.0
    %75 = vmatprep.subr.mxu0 0.0
    %76 = vmatpush1.xpose.msra.mxu0 0.0
    %77 = vmatprep.subr.mxu0 0.0
    %78 = vmatpush1.xpose.msra.mxu0 0.0
    %79 = vmatprep.subr.mxu0 0.0
    %80 = vmatpush1.xpose.msra.mxu0 0.0
    %81 = vmatprep.subr.mxu0 0.0
    %82 = vmatpush1.xpose.msra.mxu0 0.0
    %83 = vmatprep.subr.mxu0 0.0
    %84 = vmatpush1.xpose.msra.mxu0 0.0
    %85 = vmatprep.subr.mxu0 0.0
    %86 = vmatpush1.xpose.msra.mxu0 0.0
    %87 = vmatprep.subr.mxu0 0.0
    %88 = vmatpush1.xpose.msra.mxu0 0.0
    %89 = vmatprep.subr.mxu0 0.0
    %90 = vmatpush1.xpose.msra.mxu0 0.0
    %91 = vmatprep.subr.mxu0 0.0
    %92 = vmatpush1.xpose.msra.mxu0 0.0
    %93 = vmatprep.subr.mxu0 0.0
    %94 = vmatpush1.xpose.msra.mxu0 0.0
    %95 = vmatprep.subr.mxu0 0.0
    %96 = vmatpush1.xpose.msra.mxu0 0.0
    %97 = vmatprep.subr.mxu0 0.0
    %98 = vmatpush1.xpose.msra.mxu0 0.0
    %99 = vmatprep.subr.mxu0 %v61
    %100 = vmatpush1.xpose.msra.mxu0 %v46
    %101 = vmatprep.subr.mxu0 0.0
    %102 = vmatpush2.xpose.msra.mxu0 0.0
    %103 = vmatprep.subr.mxu0 0.0
    %104 = vmatpush2.xpose.msra.mxu0 0.0
    %105 = vmatprep.subr.mxu0 0.0
    %106 = vmatpush2.xpose.msra.mxu0 0.0
    %107 = vmatprep.subr.mxu0 0.0
    %108 = vmatpush2.xpose.msra.mxu0 0.0
    %109 = vmatprep.subr.mxu0 0.0
    %110 = vmatpush2.xpose.msra.mxu0 0.0
    %111 = vmatprep.subr.mxu0 0.0
    %112 = vmatpush2.xpose.msra.mxu0 0.0
    %113 = vmatprep.subr.mxu0 0.0
    %114 = vmatpush2.xpose.msra.mxu0 0.0
    %115 = vmatprep.subr.mxu0 0.0
    %116 = vmatpush2.xpose.msra.mxu0 0.0
    %117 = vmatprep.subr.mxu0 0.0
    %118 = vmatpush2.xpose.msra.mxu0 0.0
    %119 = vmatprep.subr.mxu0 0.0
    %120 = vmatpush2.xpose.msra.mxu0 0.0
    %121 = vmatprep.subr.mxu0 0.0
    %122 = vmatpush2.xpose.msra.mxu0 0.0
    %123 = vmatprep.subr.mxu0 0.0
    %124 = vmatpush2.xpose.msra.mxu0 0.0
    %125 = vmatprep.subr.mxu0 0.0
    %126 = vmatpush2.xpose.msra.mxu0 0.0
    %127 = vmatprep.subr.mxu0 0.0
    %128 = vmatpush2.xpose.msra.mxu0 0.0
    %129 = vmatprep.subr.mxu0 0.0
    %130 = vmatpush2.xpose.msra.mxu0 0.0
    %131 = vmatprep.subr.mxu0 0.0
    %132 = vmatpush2.xpose.msra.mxu0 0.0
    %133 = vmatprep.mubr.f32.mxu0 %v39
    %134 = vmatmul.mubr.f32.gmra.mxu0 %v38
    %v135 = vpop.f32.mrf.mxu0
    %v136 = vadd.f32 %v55, %v135
    %v137 = vpop.f32.mrf.mxu0
    %138 = vdwg.mxu0
    %139 = vmatprep.subr.mxu0 0.0
    %140 = vmatpush1.xpose.msra.mxu0 0.0
    %141 = vmatprep.subr.mxu0 0.0
    %142 = vmatpush1.xpose.msra.mxu0 0.0
    %143 = vmatprep.subr.mxu0 0.0
    %144 = vmatpush1.xpose.msra.mxu0 0.0
    %145 = vmatprep.subr.mxu0 0.0
    %146 = vmatpush1.xpose.msra.mxu0 0.0
    %147 = vmatprep.subr.mxu0 0.0
    %148 = vmatpush1.xpose.msra.mxu0 0.0
    %149 = vmatprep.subr.mxu0 0.0
    %150 = vmatpush1.xpose.msra.mxu0 0.0
    %151 = vmatprep.subr.mxu0 0.0
    %152 = vmatpush1.xpose.msra.mxu0 0.0
    %153 = vmatprep.subr.mxu0 0.0
    %154 = vmatpush1.xpose.msra.mxu0 0.0
    %155 = vmatprep.subr.mxu0 0.0
    %156 = vmatpush1.xpose.msra.mxu0 0.0
    %157 = vmatprep.subr.mxu0 0.0
    %158 = vmatpush1.xpose.msra.mxu0 0.0
    %159 = vmatprep.subr.mxu0 0.0
    %160 = vmatpush1.xpose.msra.mxu0 0.0
    %161 = vmatprep.subr.mxu0 0.0
    %162 = vmatpush1.xpose.msra.mxu0 0.0
    %163 = vmatprep.subr.mxu0 0.0
    %164 = vmatpush1.xpose.msra.mxu0 0.0
    %165 = vmatprep.subr.mxu0 0.0
    %166 = vmatpush1.xpose.msra.mxu0 0.0
    %167 = vmatprep.subr.mxu0 0.0
    %168 = vmatpush1.xpose.msra.mxu0 0.0
    %169 = vmatprep.subr.mxu0 %v62
    %170 = vmatpush1.xpose.msra.mxu0 %v47
    %171 = vmatprep.subr.mxu0 0.0
    %172 = vmatpush2.xpose.msra.mxu0 0.0
    %173 = vmatprep.subr.mxu0 0.0
    %174 = vmatpush2.xpose.msra.mxu0 0.0
    %175 = vmatprep.subr.mxu0 0.0
    %176 = vmatpush2.xpose.msra.mxu0 0.0
    %177 = vmatprep.subr.mxu0 0.0
    %178 = vmatpush2.xpose.msra.mxu0 0.0
    %179 = vmatprep.subr.mxu0 0.0
    %180 = vmatpush2.xpose.msra.mxu0 0.0
    %181 = vmatprep.subr.mxu0 0.0
    %182 = vmatpush2.xpose.msra.mxu0 0.0
    %183 = vmatprep.subr.mxu0 0.0
    %184 = vmatpush2.xpose.msra.mxu0 0.0
    %185 = vmatprep.subr.mxu0 0.0
    %186 = vmatpush2.xpose.msra.mxu0 0.0
    %187 = vmatprep.subr.mxu0 0.0
    %188 = vmatpush2.xpose.msra.mxu0 0.0
    %189 = vmatprep.subr.mxu0 0.0
    %190 = vmatpush2.xpose.msra.mxu0 0.0
    %191 = vmatprep.subr.mxu0 0.0
    %192 = vmatpush2.xpose.msra.mxu0 0.0
    %193 = vmatprep.subr.mxu0 0.0
    %194 = vmatpush2.xpose.msra.mxu0 0.0
    %195 = vmatprep.subr.mxu0 0.0
    %196 = vmatpush2.xpose.msra.mxu0 0.0
    %197 = vmatprep.subr.mxu0 0.0
    %198 = vmatpush2.xpose.msra.mxu0 0.0
    %199 = vmatprep.subr.mxu0 0.0
    %200 = vmatpush2.xpose.msra.mxu0 0.0
    %201 = vmatprep.subr.mxu0 0.0
    %202 = vmatpush2.xpose.msra.mxu0 0.0
    %203 = vmatprep.mubr.f32.mxu0 %v41
    %204 = vmatmul.mubr.f32.gmra.mxu0 %v40
    %v205 = vpop.f32.mrf.mxu0
    %v206 = vadd.f32 %v136, %v205
    %v207 = vpop.f32.mrf.mxu0
    %208 = vdwg.mxu0
    %209 = vmatprep.subr.mxu0 0.0
    %210 = vmatpush1.xpose.msra.mxu0 0.0
    %211 = vmatprep.subr.mxu0 0.0
    %212 = vmatpush1.xpose.msra.mxu0 0.0
    %213 = vmatprep.subr.mxu0 0.0
    %214 = vmatpush1.xpose.msra.mxu0 0.0
    %215 = vmatprep.subr.mxu0 0.0
    %216 = vmatpush1.xpose.msra.mxu0 0.0
    %217 = vmatprep.subr.mxu0 0.0
    %218 = vmatpush1.xpose.msra.mxu0 0.0
    %219 = vmatprep.subr.mxu0 0.0
    %220 = vmatpush1.xpose.msra.mxu0 0.0
    %221 = vmatprep.subr.mxu0 0.0
    %222 = vmatpush1.xpose.msra.mxu0 0.0
    %223 = vmatprep.subr.mxu0 0.0
    %224 = vmatpush1.xpose.msra.mxu0 0.0
    %225 = vmatprep.subr.mxu0 0.0
    %226 = vmatpush1.xpose.msra.mxu0 0.0
    %227 = vmatprep.subr.mxu0 0.0
    %228 = vmatpush1.xpose.msra.mxu0 0.0
    %229 = vmatprep.subr.mxu0 0.0
    %230 = vmatpush1.xpose.msra.mxu0 0.0
    %231 = vmatprep.subr.mxu0 0.0
    %232 = vmatpush1.xpose.msra.mxu0 0.0
    %233 = vmatprep.subr.mxu0 0.0
    %234 = vmatpush1.xpose.msra.mxu0 0.0
    %235 = vmatprep.subr.mxu0 0.0
    %236 = vmatpush1.xpose.msra.mxu0 0.0
    %237 = vmatprep.subr.mxu0 0.0
    %238 = vmatpush1.xpose.msra.mxu0 0.0
    %239 = vmatprep.subr.mxu0 %v63
    %240 = vmatpush1.xpose.msra.mxu0 %v48
    %241 = vmatprep.subr.mxu0 0.0
    %242 = vmatpush2.xpose.msra.mxu0 0.0
    %243 = vmatprep.subr.mxu0 0.0
    %244 = vmatpush2.xpose.msra.mxu0 0.0
    %245 = vmatprep.subr.mxu0 0.0
    %246 = vmatpush2.xpose.msra.mxu0 0.0
    %247 = vmatprep.subr.mxu0 0.0
    %248 = vmatpush2.xpose.msra.mxu0 0.0
    %249 = vmatprep.subr.mxu0 0.0
    %250 = vmatpush2.xpose.msra.mxu0 0.0
    %251 = vmatprep.subr.mxu0 0.0
    %252 = vmatpush2.xpose.msra.mxu0 0.0
    %253 = vmatprep.subr.mxu0 0.0
    %254 = vmatpush2.xpose.msra.mxu0 0.0
    %255 = vmatprep.subr.mxu0 0.0
    %256 = vmatpush2.xpose.msra.mxu0 0.0
    %257 = vmatprep.subr.mxu0 0.0
    %258 = vmatpush2.xpose.msra.mxu0 0.0
    %259 = vmatprep.subr.mxu0 0.0
    %260 = vmatpush2.xpose.msra.mxu0 0.0
    %261 = vmatprep.subr.mxu0 0.0
    %262 = vmatpush2.xpose.msra.mxu0 0.0
    %263 = vmatprep.subr.mxu0 0.0
    %264 = vmatpush2.xpose.msra.mxu0 0.0
    %265 = vmatprep.subr.mxu0 0.0
    %266 = vmatpush2.xpose.msra.mxu0 0.0
    %267 = vmatprep.subr.mxu0 0.0
    %268 = vmatpush2.xpose.msra.mxu0 0.0
    %269 = vmatprep.subr.mxu0 0.0
    %270 = vmatpush2.xpose.msra.mxu0 0.0
    %271 = vmatprep.subr.mxu0 0.0
    %272 = vmatpush2.xpose.msra.mxu0 0.0
    %273 = vmatprep.mubr.f32.mxu0 %v43
    %274 = vmatmul.mubr.f32.gmra.mxu0 %v42
    %v275 = vpop.f32.mrf.mxu0
    %v276 = vadd.f32 %v206, %v275
    %v277 = vpop.f32.mrf.mxu0
    %278 = vdwg.mxu0
    %279 = vmatprep.subr.mxu0 0.0
    %280 = vmatpush1.xpose.msra.mxu0 0.0
    %281 = vmatprep.subr.mxu0 0.0
    %282 = vmatpush1.xpose.msra.mxu0 0.0
    %283 = vmatprep.subr.mxu0 0.0
    %284 = vmatpush1.xpose.msra.mxu0 0.0
    %285 = vmatprep.subr.mxu0 0.0
    %286 = vmatpush1.xpose.msra.mxu0 0.0
    %287 = vmatprep.subr.mxu0 0.0
    %288 = vmatpush1.xpose.msra.mxu0 0.0
    %289 = vmatprep.subr.mxu0 0.0
    %290 = vmatpush1.xpose.msra.mxu0 0.0
    %291 = vmatprep.subr.mxu0 0.0
    %292 = vmatpush1.xpose.msra.mxu0 0.0
    %293 = vmatprep.subr.mxu0 0.0
    %294 = vmatpush1.xpose.msra.mxu0 0.0
    %295 = vmatprep.subr.mxu0 0.0
    %296 = vmatpush1.xpose.msra.mxu0 0.0
    %297 = vmatprep.subr.mxu0 0.0
    %298 = vmatpush1.xpose.msra.mxu0 0.0
    %299 = vmatprep.subr.mxu0 0.0
    %300 = vmatpush1.xpose.msra.mxu0 0.0
    %301 = vmatprep.subr.mxu0 0.0
    %302 = vmatpush1.xpose.msra.mxu0 0.0
    %303 = vmatprep.subr.mxu0 0.0
    %304 = vmatpush1.xpose.msra.mxu0 0.0
    %305 = vmatprep.subr.mxu0 0.0
    %306 = vmatpush1.xpose.msra.mxu0 0.0
    %307 = vmatprep.subr.mxu0 0.0
    %308 = vmatpush1.xpose.msra.mxu0 0.0
    %309 = vmatprep.subr.mxu0 %v64
    %310 = vmatpush1.xpose.msra.mxu0 %v49
    %311 = vmatprep.subr.mxu0 0.0
    %312 = vmatpush2.xpose.msra.mxu0 0.0
    %313 = vmatprep.subr.mxu0 0.0
    %314 = vmatpush2.xpose.msra.mxu0 0.0
    %315 = vmatprep.subr.mxu0 0.0
    %316 = vmatpush2.xpose.msra.mxu0 0.0
    %317 = vmatprep.subr.mxu0 0.0
    %318 = vmatpush2.xpose.msra.mxu0 0.0
    %319 = vmatprep.subr.mxu0 0.0
    %320 = vmatpush2.xpose.msra.mxu0 0.0
    %321 = vmatprep.subr.mxu0 0.0
    %322 = vmatpush2.xpose.msra.mxu0 0.0
    %323 = vmatprep.subr.mxu0 0.0
    %324 = vmatpush2.xpose.msra.mxu0 0.0
    %325 = vmatprep.subr.mxu0 0.0
    %326 = vmatpush2.xpose.msra.mxu0 0.0
    %327 = vmatprep.subr.mxu0 0.0
    %328 = vmatpush2.xpose.msra.mxu0 0.0
    %329 = vmatprep.subr.mxu0 0.0
    %330 = vmatpush2.xpose.msra.mxu0 0.0
    %331 = vmatprep.subr.mxu0 0.0
    %332 = vmatpush2.xpose.msra.mxu0 0.0
    %333 = vmatprep.subr.mxu0 0.0
    %334 = vmatpush2.xpose.msra.mxu0 0.0
    %335 = vmatprep.subr.mxu0 0.0
    %336 = vmatpush2.xpose.msra.mxu0 0.0
    %337 = vmatprep.subr.mxu0 0.0
    %338 = vmatpush2.xpose.msra.mxu0 0.0
    %339 = vmatprep.subr.mxu0 0.0
    %340 = vmatpush2.xpose.msra.mxu0 0.0
    %341 = vmatprep.subr.mxu0 0.0
    %342 = vmatpush2.xpose.msra.mxu0 0.0
    %343 = vmatprep.mubr.f32.mxu0 %v45
    %344 = vmatmul.mubr.f32.gmra.mxu0 %v44
    %v345 = vpop.f32.mrf.mxu0
    %v346 = vadd.f32 %v276, %v345
    %v347 = vpop.f32.mrf.mxu0
    %348 = vdwg.mxu0
    %vm349 = vcmask 31744
    %350 = vst.msk [vmem:[%s3] sm:$0xff] %vm349, %v346
    // Predicated region
    $region22: #{tpu_custom_call.1} parent=1 // pred_check
      _
    $region23: #{tpu_custom_call.1} parent=1 // pred_check_branch
      %352 = sbr.rel (0) target = $region25
    $region24: #{tpu_custom_call.1} parent=1 // pred_region
      _
    $region25: #{tpu_custom_call.1} parent=1 // pred_fallthru
      _
    // Predicated region
    $region26: #{tpu_custom_call.1} parent=1 // pred_check
      _
    $region27: #{tpu_custom_call.1} parent=1 // pred_check_branch
      %354 = sbr.rel (0) target = $region29
    $region28: #{tpu_custom_call.1} parent=1 // pred_region
      _
    $region29: #{tpu_custom_call.1} parent=1 // pred_fallthru
      _
    %355 = vsyncpa [#allocation3], 1
    %356 = vsyncpa [#allocation5], 1

</llo_original>
